<compile_context>
chip_gen: v5e
topology: v5e:2x2
jax: 0.10.0
libtpu: 0.0.40
codegen_flags: <defaults>
</compile_context>

<pallas_src>
import jax
import jax.numpy as jnp
from jax.experimental import pallas as pl
from jax.experimental.pallas import tpu as pltpu

_LANE = 128


def _round_up(x: int, m: int) -> int:
    return ((x + m - 1) // m) * m


def _diag_kernel(u_ref, e_ref, b_ref, o_ref):
    """o[0, i] = sigmoid( sum_d u[i,d]*e[i,d] + b[0,i] * sum_d u[i,d] )."""
    u = u_ref[...]                                            # [TN, D] f32
    e = e_ref[...]                                            # [TN, D] f32
    ones = jnp.ones((1, u.shape[1]), dtype=jnp.float32)       # [1, D]
    dims = (((1,), (1,)), ((), ()))                           # contract over D
    # Row-wise reductions as tiny matmuls: results land lane-major (1, TN), so the
    # store is a dense 128-wide vst rather than TN masked width-1 stores.
    dot_row = jax.lax.dot_general(ones, u * e, dims,
                                  preferred_element_type=jnp.float32)   # [1, TN]
    usum_row = jax.lax.dot_general(ones, u, dims,
                                   preferred_element_type=jnp.float32)  # [1, TN]
    logits = dot_row + b_ref[...] * usum_row                  # bias folded, f32
    o_ref[...] = jax.nn.sigmoid(logits)


def _full_kernel(u_ref, e_ref, b_ref, o_ref):
    """o = sigmoid( U @ E^T + rowsum(U) b^T )  for one (TN, TM) output tile."""
    u = u_ref[...]                                            # [TN, D] f32
    e = e_ref[...]                                            # [TM, D] f32
    logits = jax.lax.dot_general(
        u.astype(jnp.bfloat16), e.astype(jnp.bfloat16),       # bf16 MXU, f32 acc
        dimension_numbers=(((1,), (1,)), ((), ())),           # U @ E^T
        preferred_element_type=jnp.float32,
    )                                                         # [TN, TM] f32
    usum = jnp.sum(u, axis=-1, keepdims=True)                 # [TN, 1] f32
    logits = logits + usum * b_ref[...]                       # rank-1 bias FMA (f32)
    o_ref[...] = jax.nn.sigmoid(logits)


class RecommenderPallas:
    """Mirrors the torch Recommender's parameters that forward() actually uses."""

    def __init__(self, num_films: int = 64, embedding_dim: int = 32, seed: int = 0):
        key = jax.random.PRNGKey(seed)
        # init.normal_(weight, mean=0.0, std=0.01)
        self.film_embeddings = 0.01 * jax.random.normal(
            key, (num_films, embedding_dim), dtype=jnp.float32)
        # init.constant_(bias_embedding.weight, 0.0)
        self.film_biases = jnp.zeros((num_films, 1), dtype=jnp.float32)
        self.embedding_dim = embedding_dim
        # feed_forward_layers / Dropout are only used by get_user_embedding*, not forward().

    def forward(self, user_embeddings, film_indices, diagonal_only: bool = True,
                tile_n: int = 512, tile_m: int = 512):
        # Glue: embedding-table gather (equivalent to nn.Embedding lookup).
        emb = jnp.take(self.film_embeddings, film_indices, axis=0)          # [M, D]
        bias_row = jnp.take(self.film_biases[:, 0], film_indices)[None, :]  # [1, M] lane-major

        N, D = user_embeddings.shape
        M = emb.shape[0]

        if diagonal_only:
            assert user_embeddings.shape == emb.shape
            tn = min(tile_n, _round_up(N, _LANE))
            n_pad = _round_up(N, tn)
            u_p = jnp.pad(user_embeddings, ((0, n_pad - N), (0, 0)))
            e_p = jnp.pad(emb, ((0, n_pad - N), (0, 0)))
            b_p = jnp.pad(bias_row, ((0, 0), (0, n_pad - N)))
            out = pl.pallas_call(
                _diag_kernel,
                out_shape=jax.ShapeDtypeStruct((1, n_pad), jnp.float32),
                grid=(n_pad // tn,),
                in_specs=[
                    pl.BlockSpec((tn, D), lambda i: (i, 0)),
                    pl.BlockSpec((tn, D), lambda i: (i, 0)),
                    pl.BlockSpec((1, tn), lambda i: (0, i)),
                ],
                out_specs=pl.BlockSpec((1, tn), lambda i: (0, i)),
                compiler_params=pltpu.CompilerParams(
                    dimension_semantics=("parallel",)),
            )(u_p, e_p, b_p)
            return out[0, :N]                                               # [N]
        else:
            tn = min(tile_n, _round_up(N, _LANE))
            tm = min(tile_m, _round_up(M, _LANE))
            n_pad = _round_up(N, tn)
            m_pad = _round_up(M, tm)
            u_p = jnp.pad(user_embeddings, ((0, n_pad - N), (0, 0)))
            e_p = jnp.pad(emb, ((0, m_pad - M), (0, 0)))
            b_p = jnp.pad(bias_row, ((0, 0), (0, m_pad - M)))
            out = pl.pallas_call(
                _full_kernel,
                out_shape=jax.ShapeDtypeStruct((n_pad, m_pad), jnp.float32),
                grid=(n_pad // tn, m_pad // tm),
                in_specs=[
                    pl.BlockSpec((tn, D), lambda i, j: (i, 0)),
                    pl.BlockSpec((tm, D), lambda i, j: (j, 0)),
                    pl.BlockSpec((1, tm), lambda i, j: (0, j)),
                ],
                out_specs=pl.BlockSpec((tn, tm), lambda i, j: (i, j)),
                compiler_params=pltpu.CompilerParams(
                    dimension_semantics=("parallel", "parallel")),
            )(u_p, e_p, b_p)
            return jnp.squeeze(out[:N, :M])                                 # matches torch .squeeze()


def _reference_forward(model, user_embeddings, film_indices, diagonal_only=True):
    emb = jnp.take(model.film_embeddings, film_indices, axis=0)
    bias = jnp.take(model.film_biases, film_indices, axis=0)
    film = emb + bias
    if diagonal_only:
        logits = jnp.sum(user_embeddings * film, axis=-1)
    else:
        logits = jnp.squeeze(user_embeddings @ film.T)
    return jax.nn.sigmoid(logits)


if __name__ == "__main__":
    NUM_FILMS = 64
    EMBED_DIM = 32
    BATCH = 8

    model = RecommenderPallas(num_films=NUM_FILMS, embedding_dim=EMBED_DIM, seed=0)
    # The module initializes biases to zero; override with small values so the
    # bias-folding path is actually exercised by the check.
    model.film_biases = 0.05 * jax.random.normal(
        jax.random.PRNGKey(1), (NUM_FILMS, 1), dtype=jnp.float32)

    key = jax.random.PRNGKey(0)
    k_u, k_idx = jax.random.split(key)
    user_embeddings = jax.random.normal(k_u, (BATCH, EMBED_DIM), dtype=jnp.float32)
    film_indices = jax.random.randint(k_idx, (BATCH,), 0, NUM_FILMS, dtype=jnp.int32)

    # diagonal_only=True path
    preds_diag = jax.block_until_ready(
        model.forward(user_embeddings, film_indices, diagonal_only=True))
    ref_diag = _reference_forward(model, user_embeddings, film_indices, True)
    assert preds_diag.shape == (BATCH,)
    assert jnp.allclose(preds_diag, ref_diag, atol=1e-3), "diagonal path mismatch"

    # diagonal_only=False path (bf16 MXU operands -> relaxed tolerance)
    preds_full = jax.block_until_ready(
        model.forward(user_embeddings, film_indices, diagonal_only=False))
    ref_full = _reference_forward(model, user_embeddings, film_indices, False)
    assert preds_full.shape == (BATCH, BATCH)
    assert jnp.allclose(preds_full, ref_full, atol=2e-3), "full path mismatch"

    print("KERNEL_OK")
</pallas_src>

<mosaic_0001>
module attributes {stable_mosaic.version = 11 : i64} {
  func.func @_diag_kernel(%arg0: i32, %arg1: memref<128x32xf32, #tpu.memory_space<vmem>>, %arg2: memref<128x32xf32, #tpu.memory_space<vmem>>, %arg3: memref<1x128xf32, #tpu.memory_space<vmem>>, %arg4: memref<1x128xf32, #tpu.memory_space<vmem>>) attributes {dimension_semantics = [#tpu.dimension_semantics<parallel>], iteration_bounds = array<i64: 1>, scalar_prefetch = 0 : i64, scratch_operands = 0 : i64, tpu.core_type = #tpu.core_type<tc>, window_params = [{transform_indices = @transform_0, window_bounds = array<i64: 128, 32>}, {transform_indices = @transform_1, window_bounds = array<i64: 128, 32>}, {transform_indices = @transform_2, window_bounds = array<i64: 1, 128>}, {transform_indices = @transform_3, window_bounds = array<i64: 1, 128>}]} {
    %c0 = arith.constant 0 : index
    %c0_0 = arith.constant 0 : index
    %0 = vector.load %arg1[%c0, %c0_0] : memref<128x32xf32, #tpu.memory_space<vmem>>, vector<128x32xf32>
    %c0_1 = arith.constant 0 : index
    %c0_2 = arith.constant 0 : index
    %1 = vector.load %arg2[%c0_1, %c0_2] : memref<128x32xf32, #tpu.memory_space<vmem>>, vector<128x32xf32>
    %cst = arith.constant 1.000000e+00 : f32
    %2 = vector.broadcast %cst : f32 to vector<1x32xf32>
    %3 = arith.mulf %0, %1 : vector<128x32xf32>
    %cst_3 = arith.constant dense<0.000000e+00> : vector<1x128xf32>
    %4 = tpu.matmul %2, %3, %cst_3 {dimension_numbers = #tpu.dot_dimension_numbers<[1], [1], [0], [0], [0, 0, 1, 0], [], []>} : vector<1x32xf32>, vector<128x32xf32>, vector<1x128xf32> -> vector<1x128xf32>
    %cst_4 = arith.constant dense<0.000000e+00> : vector<1x128xf32>
    %5 = tpu.matmul %2, %0, %cst_4 {dimension_numbers = #tpu.dot_dimension_numbers<[1], [1], [0], [0], [0, 0, 1, 0], [], []>} : vector<1x32xf32>, vector<128x32xf32>, vector<1x128xf32> -> vector<1x128xf32>
    %c0_5 = arith.constant 0 : index
    %c0_6 = arith.constant 0 : index
    %6 = vector.load %arg3[%c0_5, %c0_6] : memref<1x128xf32, #tpu.memory_space<vmem>>, vector<1x128xf32>
    %7 = arith.mulf %6, %5 : vector<1x128xf32>
    %8 = arith.addf %4, %7 : vector<1x128xf32>
    %9 = arith.negf %8 : vector<1x128xf32>
    %10 = math.exp %9 : vector<1x128xf32>
    %cst_7 = arith.constant 1.000000e+00 : f32
    %11 = vector.broadcast %cst_7 : f32 to vector<1x128xf32>
    %12 = arith.addf %11, %10 : vector<1x128xf32>
    %13 = arith.divf %11, %12 : vector<1x128xf32>
    %c0_8 = arith.constant 0 : index
    %c0_9 = arith.constant 0 : index
    %14 = vector.load %arg4[%c0_8, %c0_9] : memref<1x128xf32, #tpu.memory_space<vmem>>, vector<1x128xf32>
    tpu.vector_store %arg4[%c0_8, %c0_9], %13 {strides = array<i32>} : memref<1x128xf32, #tpu.memory_space<vmem>>, vector<1x128xf32>,
    return
  }
  func.func @transform_0(%arg0: i32) -> (i32, i32) {
    %c0_i32 = arith.constant 0 : i32
    %c0_i32_0 = arith.constant 0 : i32
    return %arg0, %c0_i32 : i32, i32
  }
  func.func @transform_1(%arg0: i32) -> (i32, i32) {
    %c0_i32 = arith.constant 0 : i32
    %c0_i32_0 = arith.constant 0 : i32
    return %arg0, %c0_i32 : i32, i32
  }
  func.func @transform_2(%arg0: i32) -> (i32, i32) {
    %c0_i32 = arith.constant 0 : i32
    %c0_i32_0 = arith.constant 0 : i32
    return %c0_i32, %arg0 : i32, i32
  }
  func.func @transform_3(%arg0: i32) -> (i32, i32) {
    %c0_i32 = arith.constant 0 : i32
    %c0_i32_0 = arith.constant 0 : i32
    return %c0_i32, %arg0 : i32, i32
  }
}

</mosaic_0001>

<llo_original>
// kernel: tpu_custom_call.1
$region0: #{tpu_custom_call.1}
  #allocation0 [shape = 'u32[]', space=smem, size = 0x4, offset = 0x4, fixed_abs, tag = 'smem constant byte address 0x4 - core index']
  #allocation1 [shape = 'u32[72,128]{1,0:T(1,128)}', space=vmem, size = 0x9000, scoped, tag = 'internal scratch']
  %s0 = inlined_call_operand.vmem [shape: f32[128,32], index: 0, kind: input, shape index: {}]
  %s1 = inlined_call_operand.vmem [shape: f32[128,32], index: 1, kind: input, shape index: {}]
  %s2 = inlined_call_operand.vmem [shape: f32[1,128], index: 2, kind: input, shape index: {}]
  %s3 = inlined_call_operand.hbm [shape: f32[1,128], index: 3, kind: output, shape index: {}]
  %s4 = sld [smem:[#allocation0]]
  $region22: #{tpu_custom_call.1} parent=0
    _
  %s6 = ssub.s32 1, %s4
  %s7 = scalar_select 0, %s6, %s4
  $region1: #{tpu_custom_call.1} parent=0
    #allocation2 [shape = 'u8[512]{0}', space=vmem, size = 0x400, scoped, tag = 'output window, operand 0, single buffered']
    #allocation3 [shape = 's32[1]{0}', space=sflag, size = 0x4, scoped, tag = 'scoped memory for tpu_custom_call.1']
    %8 = vsyncpa [#allocation3], 0
    // Predicated region
    $region2: #{tpu_custom_call.1} parent=1 // pred_check
      _
    $region3: #{tpu_custom_call.1} parent=1 // pred_check_branch
      %10 = sbr.rel (0) target = $region5
    $region4: #{tpu_custom_call.1} parent=1 // pred_region
      _
    $region5: #{tpu_custom_call.1} parent=1 // pred_fallthru
      _
    // Predicated region
    $region6: #{tpu_custom_call.1} parent=1 // pred_check
      _
    $region7: #{tpu_custom_call.1} parent=1 // pred_check_branch
      %12 = sbr.rel (0) target = $region9
    $region8: #{tpu_custom_call.1} parent=1 // pred_region
      _
    $region9: #{tpu_custom_call.1} parent=1 // pred_fallthru
      _
    // Predicated region
    $region10: #{tpu_custom_call.1} parent=1 // pred_check
      _
    $region11: #{tpu_custom_call.1} parent=1 // pred_check_branch
      %14 = sbr.rel (0) target = $region13
    $region12: #{tpu_custom_call.1} parent=1 // pred_region
      _
    $region13: #{tpu_custom_call.1} parent=1 // pred_fallthru
      _
    %v15 = vld [vmem:[%s0] sm:$0xff]
    %v16 = vld [vmem:[%s0 + $0x8] sm:$0xff]
    %v17 = vld [vmem:[%s0 + $0x10] sm:$0xff]
    %v18 = vld [vmem:[%s0 + $0x18] sm:$0xff]
    %v19 = vld [vmem:[%s0 + $0x20] sm:$0xff]
    %v20 = vld [vmem:[%s0 + $0x28] sm:$0xff]
    %v21 = vld [vmem:[%s0 + $0x30] sm:$0xff]
    %v22 = vld [vmem:[%s0 + $0x38] sm:$0xff]
    %v23 = vld [vmem:[%s0 + $0x40] sm:$0xff]
    %v24 = vld [vmem:[%s0 + $0x48] sm:$0xff]
    %v25 = vld [vmem:[%s0 + $0x50] sm:$0xff]
    %v26 = vld [vmem:[%s0 + $0x58] sm:$0xff]
    %v27 = vld [vmem:[%s0 + $0x60] sm:$0xff]
    %v28 = vld [vmem:[%s0 + $0x68] sm:$0xff]
    %v29 = vld [vmem:[%s0 + $0x70] sm:$0xff]
    %v30 = vld [vmem:[%s0 + $0x78] sm:$0xff]
    %v31 = vld [vmem:[%s1] sm:$0xff]
    %v32 = vld [vmem:[%s1 + $0x8] sm:$0xff]
    %v33 = vld [vmem:[%s1 + $0x10] sm:$0xff]
    %v34 = vld [vmem:[%s1 + $0x18] sm:$0xff]
    %v35 = vld [vmem:[%s1 + $0x20] sm:$0xff]
    %v36 = vld [vmem:[%s1 + $0x28] sm:$0xff]
    %v37 = vld [vmem:[%s1 + $0x30] sm:$0xff]
    %v38 = vld [vmem:[%s1 + $0x38] sm:$0xff]
    %v39 = vld [vmem:[%s1 + $0x40] sm:$0xff]
    %v40 = vld [vmem:[%s1 + $0x48] sm:$0xff]
    %v41 = vld [vmem:[%s1 + $0x50] sm:$0xff]
    %v42 = vld [vmem:[%s1 + $0x58] sm:$0xff]
    %v43 = vld [vmem:[%s1 + $0x60] sm:$0xff]
    %v44 = vld [vmem:[%s1 + $0x68] sm:$0xff]
    %v45 = vld [vmem:[%s1 + $0x70] sm:$0xff]
    %v46 = vld [vmem:[%s1 + $0x78] sm:$0xff]
    %v47 = vmul.f32 %v15, %v31
    %v48 = vmul.f32 %v16, %v32
    %v49 = vmul.f32 %v17, %v33
    %v50 = vmul.f32 %v18, %v34
    %v51 = vmul.f32 %v19, %v35
    %v52 = vmul.f32 %v20, %v36
    %v53 = vmul.f32 %v21, %v37
    %v54 = vmul.f32 %v22, %v38
    %v55 = vmul.f32 %v23, %v39
    %v56 = vmul.f32 %v24, %v40
    %v57 = vmul.f32 %v25, %v41
    %v58 = vmul.f32 %v26, %v42
    %v59 = vmul.f32 %v27, %v43
    %v60 = vmul.f32 %v28, %v44
    %v61 = vmul.f32 %v29, %v45
    %v62 = vmul.f32 %v30, %v46
    %vm63 = vcmask 261120
    %v65 = vsel %vm63, 1.0, 0
    %v68 = vsel %vm63, %v15, 0
    %v71 = vsel %vm63, %v16, 0
    %v74 = vsel %vm63, %v17, 0
    %v77 = vsel %vm63, %v18, 0
    %v80 = vsel %vm63, %v19, 0
    %v83 = vsel %vm63, %v20, 0
    %v86 = vsel %vm63, %v21, 0
    %v89 = vsel %vm63, %v22, 0
    %v92 = vsel %vm63, %v23, 0
    %v95 = vsel %vm63, %v24, 0
    %v98 = vsel %vm63, %v25, 0
    %v101 = vsel %vm63, %v26, 0
    %v104 = vsel %vm63, %v27, 0
    %v107 = vsel %vm63, %v28, 0
    %v110 = vsel %vm63, %v29, 0
    %v113 = vsel %vm63, %v30, 0
    %115 = vmatpush.xpose.msra.mxu0 %v113
    %116 = vmatpush.xpose.msra.mxu0 %v110
    %117 = vmatpush.xpose.msra.mxu0 %v107
    %118 = vmatpush.xpose.msra.mxu0 %v104
    %119 = vmatpush.xpose.msra.mxu0 %v101
    %120 = vmatpush.xpose.msra.mxu0 %v98
    %121 = vmatpush.xpose.msra.mxu0 %v95
    %122 = vmatpush.xpose.msra.mxu0 %v92
    %123 = vmatpush.xpose.msra.mxu0 %v89
    %124 = vmatpush.xpose.msra.mxu0 %v86
    %125 = vmatpush.xpose.msra.mxu0 %v83
    %126 = vmatpush.xpose.msra.mxu0 %v80
    %127 = vmatpush.xpose.msra.mxu0 %v77
    %128 = vmatpush.xpose.msra.mxu0 %v74
    %129 = vmatpush.xpose.msra.mxu0 %v71
    %130 = vmatpush.xpose.msra.mxu0 %v68
    %131 = vmatmul.f32.gmra.mxu0 %v65
    %v132 = vpop.f32.mrf.mxu0
    %v133 = vadd.f32 0.0, %v132
    %134 = vdwg.mxu0
    %v135 = vld [vmem:[%s2] sm:$0x1]
    %v136 = vmul.f32 %v135, %v133
    %v138 = vsel %vm63, %v47, 0
    %v141 = vsel %vm63, %v48, 0
    %v144 = vsel %vm63, %v49, 0
    %v147 = vsel %vm63, %v50, 0
    %v150 = vsel %vm63, %v51, 0
    %v153 = vsel %vm63, %v52, 0
    %v156 = vsel %vm63, %v53, 0
    %v159 = vsel %vm63, %v54, 0
    %v162 = vsel %vm63, %v55, 0
    %v165 = vsel %vm63, %v56, 0
    %v168 = vsel %vm63, %v57, 0
    %v171 = vsel %vm63, %v58, 0
    %v174 = vsel %vm63, %v59, 0
    %v177 = vsel %vm63, %v60, 0
    %v180 = vsel %vm63, %v61, 0
    %v183 = vsel %vm63, %v62, 0
    %185 = vmatpush.xpose.msra.mxu0 %v183
    %186 = vmatpush.xpose.msra.mxu0 %v180
    %187 = vmatpush.xpose.msra.mxu0 %v177
    %188 = vmatpush.xpose.msra.mxu0 %v174
    %189 = vmatpush.xpose.msra.mxu0 %v171
    %190 = vmatpush.xpose.msra.mxu0 %v168
    %191 = vmatpush.xpose.msra.mxu0 %v165
    %192 = vmatpush.xpose.msra.mxu0 %v162
    %193 = vmatpush.xpose.msra.mxu0 %v159
    %194 = vmatpush.xpose.msra.mxu0 %v156
    %195 = vmatpush.xpose.msra.mxu0 %v153
    %196 = vmatpush.xpose.msra.mxu0 %v150
    %197 = vmatpush.xpose.msra.mxu0 %v147
    %198 = vmatpush.xpose.msra.mxu0 %v144
    %199 = vmatpush.xpose.msra.mxu0 %v141
    %200 = vmatpush.xpose.msra.mxu0 %v138
    %201 = vmatmul.f32.gmra.mxu0 %v65
    %v202 = vpop.f32.mrf.mxu0
    %v203 = vadd.f32 %v136, %v202
    %204 = vdwg.mxu0
    %v205 = vxor.u32 %v203, 2147483648
    %v206 = vmul.f32 %v205, 1.442695
    %v207 = vpow.pop %v206
    %v208 = vadd.f32 %v207, 1.0
    %v209 = vrcp.pop %v208
    %v210 = vmul.f32 %v208, %v209
    %v211 = vsub.f32 1.0, %v210
    %v212 = vmul.f32 %v209, %v211
    %v213 = vadd.f32 %v209, %v212
    %vm214 = vweird.f32 %v208
    %vm215 = vweird.f32 %v209
    %vm216 = vmor %vm214, %vm215
    %v217 = vsel %vm216, %v209, %v213
    %v218 = vand.u32 2147483647, %v208
    %vm219 = vcmp.eq.f32.partialorder %v218, 8.507059e+37
    %v220 = vand.u32 %v208, 2147483648
    %v221 = vor.u32 1.1754944e-38, %v220
    %v222 = vsel %vm219, %v221, %v217
    %v223 = vmul.f32 1.0, %v222
    %224 = vst [vmem:[#allocation2] sm:$0x1] %v223
    // Predicated region
    $region14: #{tpu_custom_call.1} parent=1 // pred_check
      _
    $region15: #{tpu_custom_call.1} parent=1 // pred_check_branch
      %226 = sbr.rel (0) target = $region17
    $region16: #{tpu_custom_call.1} parent=1 // pred_region
      %228 = vsyncadd [#allocation3], 0
      %s230 = sshll.u32 [#allocation2], 4
      %s231 = int_to_ptr.vmem [resolvable:$true] %s230
      %s232 = sshll.u32 %s3, 4
      %s233 = int_to_ptr.hbm [resolvable:$true] %s232
      %235 = dma.vmem_to_hbm [thread:$0]  %s231, 16, %s233, [#allocation3]
    $region17: #{tpu_custom_call.1} parent=1 // pred_fallthru
      _
    // Predicated region
    $region18: #{tpu_custom_call.1} parent=1 // pred_check
      _
    $region19: #{tpu_custom_call.1} parent=1 // pred_check_branch
      %237 = sbr.rel (0) target = $region21
    $region20: #{tpu_custom_call.1} parent=1 // pred_region
      %239 = dma.done [#allocation3], 16
    $region21: #{tpu_custom_call.1} parent=1 // pred_fallthru
      _
    %240 = vsyncpa [#allocation3], 1

</llo_original>
